<compile_context>
chip_gen: v6e
topology: v6e:2x2x1
jax: 0.10.0
libtpu: 0.0.40
codegen_flags: <defaults>
</compile_context>

<pallas_src>
import functools

import jax
import jax.numpy as jnp
from jax.experimental import pallas as pl
from jax.experimental.pallas import tpu as pltpu

_LANE = 128


def _cdiv(a, b):
    return -(-a // b)


def _round_up(a, b):
    return _cdiv(a, b) * b


def _concat_fc_kernel(x_ref, y_ref, wx_ref, wy_ref, shift_ref, o_ref):
    """One (tm, tn) output tile of the fused 1x1-conv + folded BN + ReLU.

    x_ref, y_ref   : (tm, D) token tiles in their HBM dtype (cast to bf16 here).
    wx_ref, wy_ref : (D, tn) bf16 weight halves, (in_ch, out_ch) layout with the
                     eval-mode BN scale already folded in (f32 fold in wrapper).
    shift_ref      : (1, tn) f32 folded shift = beta + (conv_bias - mean) * scale.
    """
    xb = x_ref[...].astype(jnp.bfloat16)
    yb = y_ref[...].astype(jnp.bfloat16)
    acc = jnp.dot(xb, wx_ref[...], preferred_element_type=jnp.float32)
    acc = acc + jnp.dot(yb, wy_ref[...], preferred_element_type=jnp.float32)
    acc = acc + shift_ref[...]                       # conv bias + BN (eval), folded
    o_ref[...] = jnp.maximum(acc, 0.0).astype(o_ref.dtype)   # ReLU
    # TODO(synk): training-mode dropout would go here (pltpu.prng_* mask).


def _vmem_budget_bytes():
    """Per-generation VMEM budget: ~75% of physical capacity (48 MiB on v7x's
    64 MiB, 96 MiB on v5e/v6e's 128 MiB), leaving headroom for Mosaic scratch."""
    try:
        cap = pltpu.get_tpu_info().vmem_capacity_bytes
    except Exception:
        cap = 64 * 1024 * 1024  # conservative fallback (v7x-sized)
    return int(min(0.75 * cap, 100 * 1024 * 1024))


def _choose_tn(D, budget):
    """Out-channel tile: keep the full (D, D) bf16 weight halves resident unless
    they would exceed ~half the VMEM budget; then tile N in 128-lane multiples
    (only triggers for very large D, mainly on v7x's 64 MiB)."""
    if D <= _LANE:
        return D                      # block last dim must be full dim or 128-mult
    k_rows = _round_up(D, 16)         # bf16 sublane packing of the K (in_ch) axis
    if 2 * k_rows * _round_up(D, _LANE) * 2 <= budget // 2:
        return D
    tn = ((budget // 2) // (2 * k_rows * 2)) // _LANE * _LANE
    return int(max(_LANE, min(tn, D)))


def _choose_tm(M, D, tn, in_itemsize, out_itemsize, budget):
    """Token tile: target ~2 MiB per (double-buffered) input tile so per-step
    overhead is amortized at small D, then shrink to fit a layout-aware VMEM
    budget. Multiple of 8 sublanes (or exactly M when one tile suffices)."""
    Dl = _round_up(D, _LANE)
    tnl = _round_up(tn, _LANE)
    # Resident constants (single-buffered bf16 weight halves + f32 shift).
    fixed = 2 * _round_up(D, 16) * tnl * 2 + 8 * tnl * 4
    # Per token row, layout-padded: x + y double-buffered + output double-buffered.
    per_row = 2 * (2 * Dl * in_itemsize) + 2 * tnl * out_itemsize
    tm = (2 * 1024 * 1024) // max(Dl * in_itemsize, 1)
    tm = max(256, min(tm, 8192))
    avail = max(budget - fixed, 1 << 20)
    while tm > 8 and tm * per_row > avail:
        tm //= 2
    if tm >= M:
        # One tile covers all tokens. Split into 2 roughly even tiles only if
        # both halves stay >= 512 rows (keeps v7x's two TensorCores busy;
        # single-TC v5e/v6e gain nothing from the split, and it stays cheap).
        if M >= 1024:
            tm = _round_up(_cdiv(M, 2), 8)
        else:
            tm = M                     # full-extent block: any size is legal
    else:
        tm = max(8, (tm // 8) * 8)
    return int(tm)


def _vmem_limit_bytes(M, D, tn, tm, in_itemsize, out_itemsize, budget):
    Dl = _round_up(D, _LANE)
    tnl = _round_up(tn, _LANE)
    fixed = 2 * _round_up(D, 16) * tnl * 2 + 8 * tnl * 4
    tiles = _round_up(tm, 8) * (2 * (2 * Dl * in_itemsize) + 2 * tnl * out_itemsize)
    est = fixed + tiles
    return int(min(budget, max(est + est // 2 + (2 << 20), 8 << 20)))


@functools.partial(jax.jit, static_argnames=("tm", "tn", "vmem_limit", "out_dtype"))
def _concat_fc_impl(x, y, w, b, gamma, beta, running_mean, running_var, eps,
                    *, tm, tn, vmem_limit, out_dtype):
    B, L, D = x.shape
    M = B * L
    out_dtype = jnp.dtype(out_dtype)
    in_itemsize = jnp.dtype(x.dtype).itemsize
    out_itemsize = out_dtype.itemsize

    # Fold eval-mode BatchNorm into the conv weight/bias IN F32 (before the bf16
    # cast) so quantization error is unchanged:
    #   out = relu( (W @ cat(x,y) + b - mean) * scale + beta ),
    #   scale = gamma / sqrt(var + eps).
    scale = (gamma / jnp.sqrt(running_var + eps)).astype(jnp.float32)       # (D,)
    shift = (beta + (b - running_mean) * scale).astype(jnp.float32).reshape(1, D)
    w_eff = w.astype(jnp.float32) * scale[:, None]                          # (D, 2D)
    # Pre-transpose to MXU-native (in_ch, out_ch) RHS -> plain [M,K] @ [K,N] dots.
    wxT = w_eff[:, :D].T.astype(jnp.bfloat16)                               # (D, D)
    wyT = w_eff[:, D:].T.astype(jnp.bfloat16)                               # (D, D)

    # Token-major views; NO dtype cast / NO padding in HBM (kernel casts,
    # partial final blocks cover ragged M).
    x2 = x.reshape(M, D)
    y2 = y.reshape(M, D)

    num_m = _cdiv(M, tm)
    num_n = _cdiv(D, tn)

    cost = pl.CostEstimate(
        flops=4 * M * D * D,
        transcendentals=0,
        bytes_accessed=(num_n * 2 * M * D * in_itemsize   # x, y (re-read per n tile)
                        + 2 * D * D * 2                    # bf16 weight halves
                        + D * 4                            # folded shift
                        + M * D * out_itemsize))

    out = pl.pallas_call(
        _concat_fc_kernel,
        out_shape=jax.ShapeDtypeStruct((M, D), out_dtype),
        grid_spec=pltpu.PrefetchScalarGridSpec(
            num_scalar_prefetch=0,
            # Out-channel axis OUTER (weights fetched once per n step, resident
            # across all token tiles); token axis INNER and "parallel" so v7x's
            # two TensorCores can split it.
            grid=(num_n, num_m),
            in_specs=[
                pl.BlockSpec((tm, D), lambda j, i: (i, 0)),           # x tokens
                pl.BlockSpec((tm, D), lambda j, i: (i, 0)),           # y tokens
                pl.BlockSpec((D, tn), lambda j, i: (0, j),
                             pipeline_mode=pl.Buffered(1)),           # Wx resident
                pl.BlockSpec((D, tn), lambda j, i: (0, j),
                             pipeline_mode=pl.Buffered(1)),           # Wy resident
                pl.BlockSpec((1, tn), lambda j, i: (0, j),
                             pipeline_mode=pl.Buffered(1)),           # folded shift
            ],
            out_specs=pl.BlockSpec((tm, tn), lambda j, i: (i, j)),
        ),
        compiler_params=pltpu.CompilerParams(
            dimension_semantics=("parallel", "parallel"),
            vmem_limit_bytes=vmem_limit),
        cost_estimate=cost,
    )(x2, y2, wxT, wyT, shift)

    return out.reshape(B, L, D)


def concat_fc(x, y, w, b, gamma, beta, running_mean, running_var,
              *, eps=1e-5, out_dtype=None):
    """x, y: (B, L, D).  w: (D, 2D) Conv1d(2D, D, 1) weight (kernel dim squeezed).

    out_dtype: optionally emit bf16 output if the consumer tolerates it
    (halves output-side HBM traffic on this memory-bound kernel)."""
    B, L, D = x.shape
    M = B * L
    out_dt = jnp.dtype(x.dtype if out_dtype is None else out_dtype)
    in_itemsize = jnp.dtype(x.dtype).itemsize
    out_itemsize = out_dt.itemsize

    budget = _vmem_budget_bytes()
    tn = _choose_tn(D, budget)
    tm = _choose_tm(M, D, tn, in_itemsize, out_itemsize, budget)
    vmem_limit = _vmem_limit_bytes(M, D, tn, tm, in_itemsize, out_itemsize, budget)

    return _concat_fc_impl(
        x, y, w, b, gamma, beta, running_mean, running_var, eps,
        tm=tm, tn=tn, vmem_limit=vmem_limit, out_dtype=str(out_dt))


def _reference(x, y, w, b, gamma, beta, running_mean, running_var, eps=1e-5):
    # Pure-JAX f32 reference mirroring the PyTorch forward (eval mode).
    cat = jnp.concatenate([x, y], axis=-1)                    # (B, L, 2D)
    lin = jnp.einsum("blc,dc->bld", cat, w) + b               # 1x1 Conv1d
    bn = (lin - running_mean) / jnp.sqrt(running_var + eps) * gamma + beta
    return jax.nn.relu(bn)


if __name__ == "__main__":
    def make_inputs(B, L, D, key):
        kx, ky, kw, kb, kg, kbeta, km, kv = jax.random.split(key, 8)
        x = jax.random.normal(kx, (B, L, D), dtype=jnp.float32)
        y = jax.random.normal(ky, (B, L, D), dtype=jnp.float32)
        # Conv1d(2D, D, 1): weight (D, 2D, 1) -> squeeze kernel dim -> (D, 2D).
        fan_in = 2 * D
        bound = 1.0 / (fan_in ** 0.5)
        w = jax.random.uniform(kw, (D, 2 * D), minval=-bound, maxval=bound,
                               dtype=jnp.float32)
        b = jax.random.uniform(kb, (D,), minval=-bound, maxval=bound,
                               dtype=jnp.float32)
        gamma = 1.0 + 0.1 * jax.random.normal(kg, (D,), dtype=jnp.float32)
        beta = 0.1 * jax.random.normal(kbeta, (D,), dtype=jnp.float32)
        running_mean = 0.1 * jax.random.normal(km, (D,), dtype=jnp.float32)
        running_var = jnp.abs(
            1.0 + 0.1 * jax.random.normal(kv, (D,), dtype=jnp.float32))
        return x, y, w, b, gamma, beta, running_mean, running_var

    key = jax.random.PRNGKey(0)
    k1, k2 = jax.random.split(key)

    # Primary demo shape: batch=2, seq=8, hid_dim=32.
    args = make_inputs(2, 8, 32, k1)
    out = jax.block_until_ready(concat_fc(*args))
    ref = _reference(*args)
    assert out.shape == ref.shape == (2, 8, 32)
    # bf16 weights / in-kernel bf16 activation cast with f32 accumulation.
    assert jnp.allclose(out, ref, atol=2e-2, rtol=2e-2), "mismatch vs reference"

    # Ragged token count (M = 14) exercises the partial-final-block path.
    args2 = make_inputs(2, 7, 32, k2)
    out2 = jax.block_until_ready(concat_fc(*args2))
    ref2 = _reference(*args2)
    assert out2.shape == ref2.shape == (2, 7, 32)
    assert jnp.allclose(out2, ref2, atol=2e-2, rtol=2e-2), "mismatch (ragged path)"

    print("KERNEL_OK")
</pallas_src>

<mosaic_0001>
module attributes {stable_mosaic.version = 11 : i64} {
  func.func @_concat_fc_kernel(%arg0: i32, %arg1: i32, %arg2: memref<16x32xf32, #tpu.memory_space<vmem>>, %arg3: memref<16x32xf32, #tpu.memory_space<vmem>>, %arg4: memref<32x32xbf16, #tpu.memory_space<vmem>>, %arg5: memref<32x32xbf16, #tpu.memory_space<vmem>>, %arg6: memref<1x32xf32, #tpu.memory_space<vmem>>, %arg7: memref<16x32xf32, #tpu.memory_space<vmem>>) attributes {dimension_semantics = [#tpu.dimension_semantics<parallel>, #tpu.dimension_semantics<parallel>], iteration_bounds = array<i64: 1, 1>, scalar_prefetch = 0 : i64, scratch_operands = 0 : i64, tpu.core_type = #tpu.core_type<tc>, window_params = [{transform_indices = @transform_0, window_bounds = array<i64: 16, 32>}, {transform_indices = @transform_1, window_bounds = array<i64: 16, 32>}, {pipeline_mode = #tpu.pipeline_mode<synchronous>, transform_indices = @transform_2, window_bounds = array<i64: 32, 32>}, {pipeline_mode = #tpu.pipeline_mode<synchronous>, transform_indices = @transform_3, window_bounds = array<i64: 32, 32>}, {pipeline_mode = #tpu.pipeline_mode<synchronous>, transform_indices = @transform_4, window_bounds = array<i64: 1, 32>}, {transform_indices = @transform_5, window_bounds = array<i64: 16, 32>}]} {
    %c0 = arith.constant 0 : index
    %c0_0 = arith.constant 0 : index
    %0 = vector.load %arg2[%c0, %c0_0] : memref<16x32xf32, #tpu.memory_space<vmem>>, vector<16x32xf32>
    %1 = arith.truncf %0 : vector<16x32xf32> to vector<16x32xbf16>
    %c0_1 = arith.constant 0 : index
    %c0_2 = arith.constant 0 : index
    %2 = vector.load %arg3[%c0_1, %c0_2] : memref<16x32xf32, #tpu.memory_space<vmem>>, vector<16x32xf32>
    %3 = arith.truncf %2 : vector<16x32xf32> to vector<16x32xbf16>
    %c0_3 = arith.constant 0 : index
    %c0_4 = arith.constant 0 : index
    %4 = vector.load %arg4[%c0_3, %c0_4] : memref<32x32xbf16, #tpu.memory_space<vmem>>, vector<32x32xbf16>
    %cst = arith.constant dense<0.000000e+00> : vector<16x32xf32>
    %5 = tpu.matmul %1, %4, %cst {dimension_numbers = #tpu.dot_dimension_numbers<[1], [0], [0], [1], [0, 0, 1, 1], [], []>} : vector<16x32xbf16>, vector<32x32xbf16>, vector<16x32xf32> -> vector<16x32xf32>
    %c0_5 = arith.constant 0 : index
    %c0_6 = arith.constant 0 : index
    %6 = vector.load %arg5[%c0_5, %c0_6] : memref<32x32xbf16, #tpu.memory_space<vmem>>, vector<32x32xbf16>
    %cst_7 = arith.constant dense<0.000000e+00> : vector<16x32xf32>
    %7 = tpu.matmul %3, %6, %cst_7 {dimension_numbers = #tpu.dot_dimension_numbers<[1], [0], [0], [1], [0, 0, 1, 1], [], []>} : vector<16x32xbf16>, vector<32x32xbf16>, vector<16x32xf32> -> vector<16x32xf32>
    %8 = arith.addf %5, %7 : vector<16x32xf32>
    %c0_8 = arith.constant 0 : index
    %c0_9 = arith.constant 0 : index
    %9 = vector.load %arg6[%c0_8, %c0_9] : memref<1x32xf32, #tpu.memory_space<vmem>>, vector<1x32xf32>
    %10 = vector.broadcast %9 : vector<1x32xf32> to vector<16x32xf32>
    %11 = arith.addf %8, %10 : vector<16x32xf32>
    %cst_10 = arith.constant 0.000000e+00 : f32
    %12 = vector.broadcast %cst_10 : f32 to vector<16x32xf32>
    %13 = arith.maximumf %11, %12 : vector<16x32xf32>
    %c0_11 = arith.constant 0 : index
    %c0_12 = arith.constant 0 : index
    %14 = vector.load %arg7[%c0_11, %c0_12] : memref<16x32xf32, #tpu.memory_space<vmem>>, vector<16x32xf32>
    tpu.vector_store %arg7[%c0_11, %c0_12], %13 {strides = array<i32>} : memref<16x32xf32, #tpu.memory_space<vmem>>, vector<16x32xf32>,
    return
  }
  func.func @transform_0(%arg0: i32, %arg1: i32) -> (i32, i32) {
    %c0_i32 = arith.constant 0 : i32
    %c0_i32_0 = arith.constant 0 : i32
    return %arg1, %c0_i32 : i32, i32
  }
  func.func @transform_1(%arg0: i32, %arg1: i32) -> (i32, i32) {
    %c0_i32 = arith.constant 0 : i32
    %c0_i32_0 = arith.constant 0 : i32
    return %arg1, %c0_i32 : i32, i32
  }
  func.func @transform_2(%arg0: i32, %arg1: i32) -> (i32, i32) {
    %c0_i32 = arith.constant 0 : i32
    %c0_i32_0 = arith.constant 0 : i32
    return %c0_i32, %arg0 : i32, i32
  }
  func.func @transform_3(%arg0: i32, %arg1: i32) -> (i32, i32) {
    %c0_i32 = arith.constant 0 : i32
    %c0_i32_0 = arith.constant 0 : i32
    return %c0_i32, %arg0 : i32, i32
  }
  func.func @transform_4(%arg0: i32, %arg1: i32) -> (i32, i32) {
    %c0_i32 = arith.constant 0 : i32
    %c0_i32_0 = arith.constant 0 : i32
    return %c0_i32, %arg0 : i32, i32
  }
  func.func @transform_5(%arg0: i32, %arg1: i32) -> (i32, i32) {
    %c0_i32 = arith.constant 0 : i32
    return %arg1, %arg0 : i32, i32
  }
}

</mosaic_0001>

<llo_original>
// kernel: _concat_fc_impl.1
$region0: #{_concat_fc_impl.1}
  #allocation0 [shape = 'u32[]', space=smem, size = 0x4, offset = 0x4, fixed_abs, tag = 'smem constant byte address 0x4 - core index']
  #allocation1 [shape = 'u32[144,128]{1,0:T(1,128)}', space=vmem, size = 0x12000, scoped, tag = 'internal scratch']
  %s0 = inlined_call_operand.vmem [shape: f32[16,32], index: 0, kind: input, shape index: {}]
  %s1 = inlined_call_operand.vmem [shape: f32[16,32], index: 1, kind: input, shape index: {}]
  %s2 = inlined_call_operand.vmem [shape: bf16[32,32], index: 2, kind: input, shape index: {}]
  %s3 = inlined_call_operand.vmem [shape: bf16[32,32], index: 3, kind: input, shape index: {}]
  %s4 = inlined_call_operand.vmem [shape: f32[1,32], index: 4, kind: input, shape index: {}]
  %s5 = inlined_call_operand.hbm [shape: f32[16,32], index: 5, kind: output, shape index: {}]
  %s6 = sld [smem:[#allocation0]]
  $region30: #{_concat_fc_impl.1} parent=0
    _
  %s8 = ssub.s32 1, %s6
  %s9 = scalar_select 0, %s8, %s6
  $region1: #{_concat_fc_impl.1} parent=0
    #allocation2 [shape = 'u8[8192]{0}', space=vmem, size = 0x2000, scoped, tag = 'output window, operand 0, single buffered']
    #allocation3 [shape = 's32[1]{0}', space=sflag, size = 0x4, scoped, tag = 'scoped memory for _concat_fc_impl.1']
    %10 = vsyncpa [#allocation3], 0
    // Predicated region
    $region2: #{_concat_fc_impl.1} parent=1 // pred_check
      _
    $region3: #{_concat_fc_impl.1} parent=1 // pred_check_branch
      %12 = sbr.rel (0) target = $region5
    $region4: #{_concat_fc_impl.1} parent=1 // pred_region
      _
    $region5: #{_concat_fc_impl.1} parent=1 // pred_fallthru
      _
    // Predicated region
    $region6: #{_concat_fc_impl.1} parent=1 // pred_check
      _
    $region7: #{_concat_fc_impl.1} parent=1 // pred_check_branch
      %14 = sbr.rel (0) target = $region9
    $region8: #{_concat_fc_impl.1} parent=1 // pred_region
      _
    $region9: #{_concat_fc_impl.1} parent=1 // pred_fallthru
      _
    // Predicated region
    $region10: #{_concat_fc_impl.1} parent=1 // pred_check
      _
    $region11: #{_concat_fc_impl.1} parent=1 // pred_check_branch
      %16 = sbr.rel (0) target = $region13
    $region12: #{_concat_fc_impl.1} parent=1 // pred_region
      _
    $region13: #{_concat_fc_impl.1} parent=1 // pred_fallthru
      _
    // Predicated region
    $region14: #{_concat_fc_impl.1} parent=1 // pred_check
      _
    $region15: #{_concat_fc_impl.1} parent=1 // pred_check_branch
      %18 = sbr.rel (0) target = $region17
    $region16: #{_concat_fc_impl.1} parent=1 // pred_region
      _
    $region17: #{_concat_fc_impl.1} parent=1 // pred_fallthru
      _
    // Predicated region
    $region18: #{_concat_fc_impl.1} parent=1 // pred_check
      _
    $region19: #{_concat_fc_impl.1} parent=1 // pred_check_branch
      %20 = sbr.rel (0) target = $region21
    $region20: #{_concat_fc_impl.1} parent=1 // pred_region
      _
    $region21: #{_concat_fc_impl.1} parent=1 // pred_fallthru
      _
    %v22 = vld [vmem:[%s0] sm:$0xff]
    %v23 = vld [vmem:[%s0 + $0x8] sm:$0xff]
    %v24 = vpack.c.bf16 %v23, %v22
    %v25 = vld [vmem:[%s1] sm:$0xff]
    %v26 = vld [vmem:[%s1 + $0x8] sm:$0xff]
    %v27 = vpack.c.bf16 %v26, %v25
    %v28 = vld [vmem:[%s2] sm:$0xf]
    %v29 = vld [vmem:[%s2 + $0x4] sm:$0xf]
    %v30 = vld [vmem:[%s2 + $0x8] sm:$0xf]
    %v31 = vld [vmem:[%s2 + $0xc] sm:$0xf]
    %v32 = vld [vmem:[%s3] sm:$0xf]
    %v33 = vld [vmem:[%s3 + $0x4] sm:$0xf]
    %v34 = vld [vmem:[%s3 + $0x8] sm:$0xf]
    %v35 = vld [vmem:[%s3 + $0xc] sm:$0xf]
    %v40 = vunpack.c.l.b16 %v32
    %v41 = vunpack.c.l.b16 %v33
    %v42 = vunpack.c.l.b16 %v34
    %v43 = vunpack.c.l.b16 %v35
    %v44 = vpack.c.b16 %v41, %v40
    %v45 = vpack.c.b16 %v43, %v42
    %vm48 = vcmask 261120
    %v50 = vsel %vm48, %v27, 0
    %52 = vmatprep.subr.bf16.mxu0 0
    %53 = vmatpush1.bf16.msra.mxu0 0
    %54 = vmatprep.subr.bf16.mxu0 0
    %55 = vmatpush1.bf16.msra.mxu0 0
    %56 = vmatprep.subr.bf16.mxu0 0
    %57 = vmatpush1.bf16.msra.mxu0 0
    %58 = vmatprep.subr.bf16.mxu0 0
    %59 = vmatpush1.bf16.msra.mxu0 0
    %60 = vmatprep.subr.bf16.mxu0 0
    %61 = vmatpush1.bf16.msra.mxu0 0
    %62 = vmatprep.subr.bf16.mxu0 0
    %63 = vmatpush1.bf16.msra.mxu0 0
    %64 = vmatprep.subr.bf16.mxu0 0
    %65 = vmatpush1.bf16.msra.mxu0 %v45
    %66 = vmatprep.subr.bf16.mxu0 0
    %67 = vmatpush1.bf16.msra.mxu0 %v44
    %68 = vmatprep.subr.bf16.mxu0 0
    %69 = vmatpush2.bf16.msra.mxu0 0
    %70 = vmatprep.subr.bf16.mxu0 0
    %71 = vmatpush2.bf16.msra.mxu0 0
    %72 = vmatprep.subr.bf16.mxu0 0
    %73 = vmatpush2.bf16.msra.mxu0 0
    %74 = vmatprep.subr.bf16.mxu0 0
    %75 = vmatpush2.bf16.msra.mxu0 0
    %76 = vmatprep.subr.bf16.mxu0 0
    %77 = vmatpush2.bf16.msra.mxu0 0
    %78 = vmatprep.subr.bf16.mxu0 0
    %79 = vmatpush2.bf16.msra.mxu0 0
    %80 = vmatprep.subr.bf16.mxu0 0
    %81 = vmatpush2.bf16.msra.mxu0 0
    %82 = vmatprep.subr.bf16.mxu0 0
    %83 = vmatpush2.bf16.msra.mxu0 0
    %84 = vmatprep.mubr.bf16.mxu0 0
    %85 = vmatmul.mubr.bf16.gmra.mxu0 %v50
    %v86 = vpop.f32.mrf.mxu0
    %v87 = vadd.f32 0.0, %v86
    %v88 = vpop.f32.mrf.mxu0
    %v89 = vpop.f32.mrf.mxu0
    %v90 = vadd.f32 0.0, %v89
    %v91 = vpop.f32.mrf.mxu0
    %92 = vdwg.mxu0
    %v97 = vunpack.c.l.b16 %v28
    %v98 = vunpack.c.l.b16 %v29
    %v99 = vunpack.c.l.b16 %v30
    %v100 = vunpack.c.l.b16 %v31
    %v101 = vpack.c.b16 %v98, %v97
    %v102 = vpack.c.b16 %v100, %v99
    %v106 = vsel %vm48, %v24, 0
    %108 = vmatprep.subr.bf16.mxu0 0
    %109 = vmatpush1.bf16.msra.mxu0 0
    %110 = vmatprep.subr.bf16.mxu0 0
    %111 = vmatpush1.bf16.msra.mxu0 0
    %112 = vmatprep.subr.bf16.mxu0 0
    %113 = vmatpush1.bf16.msra.mxu0 0
    %114 = vmatprep.subr.bf16.mxu0 0
    %115 = vmatpush1.bf16.msra.mxu0 0
    %116 = vmatprep.subr.bf16.mxu0 0
    %117 = vmatpush1.bf16.msra.mxu0 0
    %118 = vmatprep.subr.bf16.mxu0 0
    %119 = vmatpush1.bf16.msra.mxu0 0
    %120 = vmatprep.subr.bf16.mxu0 0
    %121 = vmatpush1.bf16.msra.mxu0 %v102
    %122 = vmatprep.subr.bf16.mxu0 0
    %123 = vmatpush1.bf16.msra.mxu0 %v101
    %124 = vmatprep.subr.bf16.mxu0 0
    %125 = vmatpush2.bf16.msra.mxu0 0
    %126 = vmatprep.subr.bf16.mxu0 0
    %127 = vmatpush2.bf16.msra.mxu0 0
    %128 = vmatprep.subr.bf16.mxu0 0
    %129 = vmatpush2.bf16.msra.mxu0 0
    %130 = vmatprep.subr.bf16.mxu0 0
    %131 = vmatpush2.bf16.msra.mxu0 0
    %132 = vmatprep.subr.bf16.mxu0 0
    %133 = vmatpush2.bf16.msra.mxu0 0
    %134 = vmatprep.subr.bf16.mxu0 0
    %135 = vmatpush2.bf16.msra.mxu0 0
    %136 = vmatprep.subr.bf16.mxu0 0
    %137 = vmatpush2.bf16.msra.mxu0 0
    %138 = vmatprep.subr.bf16.mxu0 0
    %139 = vmatpush2.bf16.msra.mxu0 0
    %140 = vmatprep.mubr.bf16.mxu0 0
    %141 = vmatmul.mubr.bf16.gmra.mxu0 %v106
    %v142 = vpop.f32.mrf.mxu0
    %v143 = vadd.f32 %v87, %v142
    %v144 = vpop.f32.mrf.mxu0
    %v145 = vpop.f32.mrf.mxu0
    %v146 = vadd.f32 %v90, %v145
    %v147 = vpop.f32.mrf.mxu0
    %148 = vdwg.mxu0
    %v149 = vld [vmem:[%s4] sm:$0x1]
    %v151 = vlaneseq
    %v152 = vshrl.u32 %v151, 7
    %v153 = vsub.s32 0, %v152
    %v154 = vrot.slane %v149, %v153
    %v156 = vadd.f32 %v143, %v154
    %v157 = vadd.f32 %v146, %v154
    %v158 = vmax.f32 %v156, 0.0
    %v159 = vmax.f32 %v157, 0.0
    %160 = vst.msk [vmem:[#allocation2] sm:$0xff] %vm48, %v158
    %161 = vst.msk [vmem:[#allocation2 + $0x8] sm:$0xff] %vm48, %v159
    // Predicated region
    $region22: #{_concat_fc_impl.1} parent=1 // pred_check
      _
    $region23: #{_concat_fc_impl.1} parent=1 // pred_check_branch
      %163 = sbr.rel (0) target = $region25
    $region24: #{_concat_fc_impl.1} parent=1 // pred_region
      %s165 = ssub.s32 256, 256
      %166 = vsyncadd [#allocation3], %s165
      %s167 = sshll.u32 [#allocation2], 4
      %s168 = int_to_ptr.vmem [resolvable:$true] %s167
      %173 = dma.vmem_to_hbm [thread:$0]  %s168, 256, %s5, [#allocation3], 128, 128, 8
    $region25: #{_concat_fc_impl.1} parent=1 // pred_fallthru
      _
    // Predicated region
    $region26: #{_concat_fc_impl.1} parent=1 // pred_check
      _
    $region27: #{_concat_fc_impl.1} parent=1 // pred_check_branch
      %175 = sbr.rel (0) target = $region29
    $region28: #{_concat_fc_impl.1} parent=1 // pred_region
      %176 = dma.done [#allocation3], 256
    $region29: #{_concat_fc_impl.1} parent=1 // pred_fallthru
      _
    %177 = vsyncpa [#allocation3], 1

</llo_original>
